<compile_context>
chip_gen: v5e
topology: v5e:2x2
jax: 0.10.0
libtpu: 0.0.40
codegen_flags: <defaults>
</compile_context>

<pallas_src>
import functools
import math

import jax
import jax.numpy as jnp
from jax.experimental import pallas as pl
from jax.experimental.pallas import tpu as pltpu


# ----------------------------- VMEM / tiling helpers ------------------------ #
def _default_vmem_limit():
    # ~75% of physical per-core VMEM: 48 MiB on v7x (64 MiB phys), 96 MiB on v5e/v6e.
    try:
        info = pltpu.get_tpu_info()
        cap = getattr(info, "vmem_capacity_bytes", 0)
        if cap:
            return int(cap * 3 // 4)
    except Exception:
        pass
    return 48 * 1024 * 1024


_VMEM_LIMIT_BYTES = _default_vmem_limit()


def _round_up(x, m):
    return ((x + m - 1) // m) * m


def _pick_tile_rows(rows, width, itemsize=4, budget_bytes=8 * 1024 * 1024, cap=2048):
    """Biggest row tile (multiple of 8, <= cap) whose (tile, width) slab fits budget."""
    tr = budget_bytes // max(1, width * itemsize)
    tr = max(8, min(cap, (tr // 8) * 8))
    tr = min(tr, _round_up(rows, 8))
    return max(8, tr)


def _pick_col_tile(n, target=512):
    for cand in (target, 256, 128):
        if n % cand == 0:
            return cand
    return n  # full dim (allowed when block == array dim)


# ------------------ fused MHA + fc_out + residual + LN + scale -------------- #
def _mha_ln_kernel(*refs, heads, sm_scale, epsilon, scale, use_mask):
    if use_mask:
        q_ref, k_ref, v_ref, m_ref, wo_ref, bo_ref, g_ref, bt_ref, o_ref = refs
    else:
        q_ref, k_ref, v_ref, wo_ref, bo_ref, g_ref, bt_ref, o_ref = refs
        m_ref = None

    q2 = q_ref[0]                      # (Lq, E) — also the residual (query == residual)
    k2 = k_ref[0]                      # (Lk, E)
    v2 = v_ref[0]                      # (Lk, E)
    lq, e = q2.shape
    hd = e // heads
    if use_mask:
        m2 = m_ref[0]                  # (Lq, Lk), broadcast over heads

    # Per-head attention (static unroll) with fused fc_out accumulation:
    #   y += ctx_h @ Wo[h*D:(h+1)*D, :]   -> (Lq, E) stays lane-dense.
    y = None
    for h in range(heads):
        sl = slice(h * hd, (h + 1) * hd)
        q_h = q2[:, sl]                # (Lq, D)  — operands stay in the input dtype
        k_h = k2[:, sl]                # (Lk, D)
        v_h = v2[:, sl]                # (Lk, D)

        # energy = q_h @ k_h^T  (MXU, f32 accumulate)
        energy = jax.lax.dot_general(
            q_h, k_h, (((1,), (1,)), ((), ())),
            preferred_element_type=jnp.float32)            # (Lq, Lk)
        if use_mask:
            energy = jnp.where(m2 == 0, -1e20, energy)     # mask BEFORE scaling (torch)
        logits = energy * sm_scale
        logits = logits - jnp.max(logits, axis=-1, keepdims=True)
        p = jnp.exp(logits)
        attn = p * pl.reciprocal(jnp.sum(p, axis=-1, keepdims=True), approx=True)

        ctx_h = jnp.dot(attn.astype(v_h.dtype), v_h,
                        preferred_element_type=jnp.float32)  # (Lq, D)
        proj = jnp.dot(ctx_h.astype(wo_ref.dtype), wo_ref[sl, :],
                       preferred_element_type=jnp.float32)   # (Lq, E)
        y = proj if y is None else y + proj

    y = y + bo_ref[...].astype(jnp.float32)

    # Fused residual add + LayerNorm(eps) + dropout scale (eval mode: x * (1 - p)).
    xr = y + q2.astype(jnp.float32)
    mean = jnp.mean(xr, axis=-1, keepdims=True)
    xc = xr - mean
    var = jnp.mean(xc * xc, axis=-1, keepdims=True)           # unbiased=False
    out = (g_ref[...].astype(jnp.float32) * (xc * jax.lax.rsqrt(var + epsilon))
           + bt_ref[...].astype(jnp.float32))
    o_ref[0] = (out * scale).astype(o_ref.dtype)


def multi_head_attention_add_ln(query, keys, values, mask, wo, bo, gamma, beta, *,
                                heads, epsilon, scale):
    """out = scale * LayerNorm( MHA(query, keys, values, mask) @ Wo + bo + query )."""
    N, lq, e = query.shape
    lk = keys.shape[1]
    hd = e // heads
    assert hd * heads == e, "Embedding size needs to be divisible by heads"
    sm_scale = 1.0 / math.sqrt(hd)

    in_specs = [
        pl.BlockSpec((1, lq, e), lambda n: (n, 0, 0)),
        pl.BlockSpec((1, lk, e), lambda n: (n, 0, 0)),
        pl.BlockSpec((1, lk, e), lambda n: (n, 0, 0)),
    ]
    args = [query, keys, values]

    use_mask = mask is not None
    if use_mask:
        m = jnp.asarray(mask)
        while m.ndim < 4:
            m = m[None]
        # TODO(synk): per-head (non-broadcast) attention masks are not supported here.
        m = m[:, 0]                                         # drop the broadcast heads dim
        mb = 1 if m.shape[0] == 1 else N
        m = jnp.broadcast_to(m, (mb, lq, lk)).astype(jnp.int32)
        if mb > 1:
            in_specs.append(pl.BlockSpec((1, lq, lk), lambda n: (n, 0, 0)))
        else:
            in_specs.append(pl.BlockSpec((1, lq, lk), lambda n: (0, 0, 0)))
        args.append(m)

    in_specs += [
        pl.BlockSpec((e, e), lambda n: (0, 0)),
        pl.BlockSpec((1, e), lambda n: (0, 0)),
        pl.BlockSpec((1, e), lambda n: (0, 0)),
        pl.BlockSpec((1, e), lambda n: (0, 0)),
    ]
    args += [wo, bo.reshape(1, e), gamma.reshape(1, e), beta.reshape(1, e)]

    return pl.pallas_call(
        functools.partial(_mha_ln_kernel, heads=heads, sm_scale=sm_scale,
                          epsilon=epsilon, scale=scale, use_mask=use_mask),
        out_shape=jax.ShapeDtypeStruct((N, lq, e), query.dtype),
        grid_spec=pltpu.PrefetchScalarGridSpec(
            num_scalar_prefetch=0,
            grid=(N,),
            in_specs=in_specs,
            out_specs=pl.BlockSpec((1, lq, e), lambda n: (n, 0, 0)),
        ),
        compiler_params=pltpu.CompilerParams(
            dimension_semantics=("parallel",),
            vmem_limit_bytes=_VMEM_LIMIT_BYTES,
        ),
    )(*args)


# ---------------- fused FFN (Linear->ReLU->Linear) + residual + LN ---------- #
def _ffn_ln_kernel(x_ref, w1_ref, b1_ref, w2_ref, b2_ref, g_ref, bt_ref, o_ref,
                   acc_ref, *, epsilon, scale):
    j = pl.program_id(1)

    @pl.when(j == 0)
    def _():
        acc_ref[...] = jnp.zeros_like(acc_ref)

    x = x_ref[...]                                       # input dtype straight to MXU
    h = jnp.dot(x, w1_ref[...], preferred_element_type=jnp.float32)
    h = jnp.maximum(h + b1_ref[...].astype(jnp.float32), 0.0)
    acc_ref[...] += jnp.dot(h.astype(w2_ref.dtype), w2_ref[...],
                            preferred_element_type=jnp.float32)

    @pl.when(j == pl.num_programs(1) - 1)
    def _():
        y = acc_ref[...] + b2_ref[...].astype(jnp.float32)
        xr = y + x_ref[...].astype(jnp.float32)          # residual (block already in VMEM)
        mean = jnp.mean(xr, axis=-1, keepdims=True)
        xc = xr - mean
        var = jnp.mean(xc * xc, axis=-1, keepdims=True)  # unbiased=False
        out = (g_ref[...].astype(jnp.float32) * (xc * jax.lax.rsqrt(var + epsilon))
               + bt_ref[...].astype(jnp.float32))
        o_ref[...] = (out * scale).astype(o_ref.dtype)


def feed_forward_add_ln(x, w1, b1, w2, b2, gamma, beta, *, epsilon, scale):
    """out = scale * LayerNorm( relu(x @ w1 + b1) @ w2 + b2 + x )."""
    orig_shape = x.shape
    e = orig_shape[-1]
    f = w1.shape[1]
    rows = math.prod(orig_shape[:-1])
    x2 = x.reshape(rows, e)

    tile_rows = _pick_tile_rows(rows, max(e, f), x.dtype.itemsize)
    tile_f = _pick_col_tile(f)
    grid = (pl.cdiv(rows, tile_rows), f // tile_f)       # ragged last row-block is masked

    out2 = pl.pallas_call(
        functools.partial(_ffn_ln_kernel, epsilon=epsilon, scale=scale),
        out_shape=jax.ShapeDtypeStruct((rows, e), x.dtype),
        grid_spec=pltpu.PrefetchScalarGridSpec(
            num_scalar_prefetch=0,
            grid=grid,
            in_specs=[
                pl.BlockSpec((tile_rows, e), lambda i, j: (i, 0)),
                pl.BlockSpec((e, tile_f), lambda i, j: (0, j)),
                pl.BlockSpec((1, tile_f), lambda i, j: (0, j)),
                pl.BlockSpec((tile_f, e), lambda i, j: (j, 0)),
                pl.BlockSpec((1, e), lambda i, j: (0, 0)),
                pl.BlockSpec((1, e), lambda i, j: (0, 0)),
                pl.BlockSpec((1, e), lambda i, j: (0, 0)),
            ],
            out_specs=pl.BlockSpec((tile_rows, e), lambda i, j: (i, 0)),
            scratch_shapes=[pltpu.VMEM((tile_rows, e), jnp.float32)],
        ),
        compiler_params=pltpu.CompilerParams(
            dimension_semantics=("parallel", "arbitrary"),
            vmem_limit_bytes=_VMEM_LIMIT_BYTES,
        ),
    )(x2, w1, b1.reshape(1, f), w2, b2.reshape(1, e),
      gamma.reshape(1, e), beta.reshape(1, e))

    return out2.reshape(orig_shape)


# ------------------------------ DecoderBlock -------------------------------- #
def decoder_block_forward(params, x, enc_out, src_mask, trg_mask, *, heads, dropout_p,
                          epsilon=1e-6):
    scale = 1.0 - dropout_p   # eval-mode CustomDropout: x * (1 - p)

    x = multi_head_attention_add_ln(
        x, x, x, trg_mask, params["wo1"], params["bo1"], params["g1"], params["b1"],
        heads=heads, epsilon=epsilon, scale=scale)
    x = multi_head_attention_add_ln(
        x, enc_out, enc_out, src_mask, params["wo2"], params["bo2"],
        params["g2"], params["b2"], heads=heads, epsilon=epsilon, scale=scale)
    out = feed_forward_add_ln(
        x, params["w_ff1"], params["b_ff1"], params["w_ff2"], params["b_ff2"],
        params["g3"], params["b3"], epsilon=epsilon, scale=scale)
    return out


# ---------------------------- pure-JAX reference ---------------------------- #
def _ln_ref(x, g, b, eps=1e-6):
    mean = jnp.mean(x, -1, keepdims=True)
    var = jnp.mean((x - mean) ** 2, -1, keepdims=True)
    return g * ((x - mean) * jax.lax.rsqrt(var + eps)) + b


def _mha_ref(query, keys, values, mask, wo, bo, heads):
    N, Lq, E = query.shape
    Lk = keys.shape[1]
    D = E // heads
    q = query.reshape(N, Lq, heads, D)
    k = keys.reshape(N, Lk, heads, D)
    v = values.reshape(N, Lk, heads, D)
    energy = jnp.einsum("nqhd,nkhd->nhqk", q, k)
    if mask is not None:
        energy = jnp.where(jnp.broadcast_to(mask, energy.shape) == 0, -1e20, energy)
    logits = energy / math.sqrt(D)
    logits = logits - jnp.max(logits, axis=-1, keepdims=True)
    p = jnp.exp(logits)
    attn = p / jnp.sum(p, axis=-1, keepdims=True)
    out = jnp.einsum("nhqk,nkhd->nqhd", attn, v).reshape(N, Lq, E)
    return out @ wo + bo


def decoder_block_ref(params, x, enc_out, src_mask, trg_mask, *, heads, dropout_p):
    s = 1.0 - dropout_p
    sa = _mha_ref(x, x, x, trg_mask, params["wo1"], params["bo1"], heads)
    x = s * _ln_ref(sa + x, params["g1"], params["b1"])
    eda = _mha_ref(x, enc_out, enc_out, src_mask, params["wo2"], params["bo2"], heads)
    x = s * _ln_ref(eda + x, params["g2"], params["b2"])
    ff = jnp.maximum(x @ params["w_ff1"] + params["b_ff1"], 0.0) @ params["w_ff2"] + params["b_ff2"]
    return s * _ln_ref(ff + x, params["g3"], params["b3"])


# ----------------------------------- demo ----------------------------------- #
if __name__ == "__main__":
    key = jax.random.PRNGKey(0)
    N, S, E, H, FEXP, P = 2, 8, 128, 4, 4, 0.1   # embed=128 keeps outputs lane-dense
    F = FEXP * E

    ks = jax.random.split(key, 12)
    x = jax.random.normal(ks[0], (N, S, E), jnp.float32)
    enc_out = jax.random.normal(ks[1], (N, S, E), jnp.float32)
    trg_mask = jnp.tril(jnp.ones((S, S), jnp.float32)).reshape(1, 1, S, S)
    src_mask = None

    def lin_init(k, fan_in, shape):
        return jax.random.uniform(k, shape, jnp.float32, -1.0, 1.0) / math.sqrt(fan_in)

    params = {
        "wo1": lin_init(ks[2], E, (E, E)), "bo1": lin_init(ks[3], E, (E,)),
        "g1": jnp.ones((E,), jnp.float32), "b1": jnp.zeros((E,), jnp.float32),
        "wo2": lin_init(ks[4], E, (E, E)), "bo2": lin_init(ks[5], E, (E,)),
        "g2": jnp.ones((E,), jnp.float32), "b2": jnp.zeros((E,), jnp.float32),
        "w_ff1": lin_init(ks[6], E, (E, F)), "b_ff1": lin_init(ks[7], E, (F,)),
        "w_ff2": lin_init(ks[8], F, (F, E)), "b_ff2": lin_init(ks[9], F, (E,)),
        "g3": jnp.ones((E,), jnp.float32), "b3": jnp.zeros((E,), jnp.float32),
    }

    out = decoder_block_forward(params, x, enc_out, src_mask, trg_mask,
                                heads=H, dropout_p=P)
    out = jax.block_until_ready(out)

    ref = decoder_block_ref(params, x, enc_out, src_mask, trg_mask,
                            heads=H, dropout_p=P)
    assert out.shape == x.shape
    # Tightened from 5e-2; f32 matmul accumulation throughout, the residual slack
    # covers the EUP approximate-reciprocal used in the softmax normalization.
    err = float(jnp.max(jnp.abs(out - ref)))
    assert err < 1e-2, f"max abs error {err}"

    print("KERNEL_OK")
</pallas_src>

<mosaic_0001>
module attributes {stable_mosaic.version = 11 : i64} {
  func.func @_mha_ln_kernel(%arg0: i32, %arg1: memref<1x8x128xf32, #tpu.memory_space<vmem>>, %arg2: memref<1x8x128xf32, #tpu.memory_space<vmem>>, %arg3: memref<1x8x128xf32, #tpu.memory_space<vmem>>, %arg4: memref<1x8x8xi32, #tpu.memory_space<vmem>>, %arg5: memref<128x128xf32, #tpu.memory_space<vmem>>, %arg6: memref<1x128xf32, #tpu.memory_space<vmem>>, %arg7: memref<1x128xf32, #tpu.memory_space<vmem>>, %arg8: memref<1x128xf32, #tpu.memory_space<vmem>>, %arg9: memref<1x8x128xf32, #tpu.memory_space<vmem>>) attributes {dimension_semantics = [#tpu.dimension_semantics<parallel>], iteration_bounds = array<i64: 2>, scalar_prefetch = 0 : i64, scratch_operands = 0 : i64, tpu.core_type = #tpu.core_type<tc>, window_params = [{transform_indices = @transform_0, window_bounds = array<i64: 1, 8, 128>}, {transform_indices = @transform_1, window_bounds = array<i64: 1, 8, 128>}, {transform_indices = @transform_2, window_bounds = array<i64: 1, 8, 128>}, {pipeline_mode = #tpu.pipeline_mode<synchronous>, transform_indices = @transform_3, window_bounds = array<i64: 1, 8, 8>}, {pipeline_mode = #tpu.pipeline_mode<synchronous>, transform_indices = @transform_4, window_bounds = array<i64: 128, 128>}, {pipeline_mode = #tpu.pipeline_mode<synchronous>, transform_indices = @transform_5, window_bounds = array<i64: 1, 128>}, {pipeline_mode = #tpu.pipeline_mode<synchronous>, transform_indices = @transform_6, window_bounds = array<i64: 1, 128>}, {pipeline_mode = #tpu.pipeline_mode<synchronous>, transform_indices = @transform_7, window_bounds = array<i64: 1, 128>}, {transform_indices = @transform_8, window_bounds = array<i64: 1, 8, 128>}]} {
    %c0 = arith.constant 0 : index
    %c0_0 = arith.constant 0 : index
    %c0_1 = arith.constant 0 : index
    %0 = vector.load %arg1[%c0, %c0_0, %c0_1] : memref<1x8x128xf32, #tpu.memory_space<vmem>>, vector<1x8x128xf32>
    %1 = vector.shape_cast %0 : vector<1x8x128xf32> to vector<8x128xf32>
    %c0_2 = arith.constant 0 : index
    %c0_3 = arith.constant 0 : index
    %c0_4 = arith.constant 0 : index
    %2 = vector.load %arg2[%c0_2, %c0_3, %c0_4] : memref<1x8x128xf32, #tpu.memory_space<vmem>>, vector<1x8x128xf32>
    %3 = vector.shape_cast %2 : vector<1x8x128xf32> to vector<8x128xf32>
    %c0_5 = arith.constant 0 : index
    %c0_6 = arith.constant 0 : index
    %c0_7 = arith.constant 0 : index
    %4 = vector.load %arg3[%c0_5, %c0_6, %c0_7] : memref<1x8x128xf32, #tpu.memory_space<vmem>>, vector<1x8x128xf32>
    %5 = vector.shape_cast %4 : vector<1x8x128xf32> to vector<8x128xf32>
    %c0_8 = arith.constant 0 : index
    %c0_9 = arith.constant 0 : index
    %c0_10 = arith.constant 0 : index
    %6 = vector.load %arg4[%c0_8, %c0_9, %c0_10] : memref<1x8x8xi32, #tpu.memory_space<vmem>>, vector<1x8x8xi32>
    %7 = vector.shape_cast %6 : vector<1x8x8xi32> to vector<8x8xi32>
    %8 = vector.extract_strided_slice %1 {offsets = [0, 0], sizes = [8, 32], strides = [1, 1]} : vector<8x128xf32> to vector<8x32xf32>
    %9 = vector.extract_strided_slice %3 {offsets = [0, 0], sizes = [8, 32], strides = [1, 1]} : vector<8x128xf32> to vector<8x32xf32>
    %10 = vector.extract_strided_slice %5 {offsets = [0, 0], sizes = [8, 32], strides = [1, 1]} : vector<8x128xf32> to vector<8x32xf32>
    %cst = arith.constant dense<0.000000e+00> : vector<8x8xf32>
    %11 = tpu.matmul %8, %9, %cst {dimension_numbers = #tpu.dot_dimension_numbers<[1], [1], [0], [0], [0, 0, 1, 0], [], []>} : vector<8x32xf32>, vector<8x32xf32>, vector<8x8xf32> -> vector<8x8xf32>
    %c0_i32 = arith.constant 0 : i32
    %12 = vector.broadcast %c0_i32 : i32 to vector<8x8xi32>
    %13 = arith.cmpi eq, %7, %12 : vector<8x8xi32>
    %cst_11 = arith.constant -1.000000e+20 : f32
    %14 = vector.broadcast %cst_11 : f32 to vector<8x8xf32>
    %15 = arith.select %13, %14, %11 : vector<8x8xi1>, vector<8x8xf32>
    %cst_12 = arith.constant 0.176776692 : f32
    %16 = vector.broadcast %cst_12 : f32 to vector<8x8xf32>
    %17 = arith.mulf %15, %16 : vector<8x8xf32>
    %cst_13 = arith.constant dense<0xFF800000> : vector<8xf32>
    %18 = vector.multi_reduction <maximumf>, %17, %cst_13 [1] : vector<8x8xf32> to vector<8xf32>
    %19 = vector.shape_cast %18 : vector<8xf32> to vector<8x1xf32>
    %20 = vector.broadcast %19 : vector<8x1xf32> to vector<8x8xf32>
    %21 = arith.subf %17, %20 : vector<8x8xf32>
    %22 = math.exp %21 : vector<8x8xf32>
    %cst_14 = arith.constant dense<0.000000e+00> : vector<8xf32>
    %23 = vector.multi_reduction <add>, %22, %cst_14 [1] : vector<8x8xf32> to vector<8xf32>
    %24 = vector.shape_cast %23 : vector<8xf32> to vector<8x1xf32>
    %25 = tpu.reciprocal %24 {approx = true} : vector<8x1xf32> -> vector<8x1xf32>
    %26 = vector.broadcast %25 : vector<8x1xf32> to vector<8x8xf32>
    %27 = arith.mulf %22, %26 : vector<8x8xf32>
    %cst_15 = arith.constant dense<0.000000e+00> : vector<8x32xf32>
    %28 = tpu.matmul %27, %10, %cst_15 {dimension_numbers = #tpu.dot_dimension_numbers<[1], [0], [0], [1], [0, 0, 1, 1], [], []>} : vector<8x8xf32>, vector<8x32xf32>, vector<8x32xf32> -> vector<8x32xf32>
    %c0_16 = arith.constant 0 : index
    %c0_17 = arith.constant 0 : index
    %29 = vector.load %arg5[%c0_16, %c0_17] : memref<128x128xf32, #tpu.memory_space<vmem>>, vector<32x128xf32>
    %cst_18 = arith.constant dense<0.000000e+00> : vector<8x128xf32>
    %30 = tpu.matmul %28, %29, %cst_18 {dimension_numbers = #tpu.dot_dimension_numbers<[1], [0], [0], [1], [0, 0, 1, 1], [], []>} : vector<8x32xf32>, vector<32x128xf32>, vector<8x128xf32> -> vector<8x128xf32>
    %31 = vector.extract_strided_slice %1 {offsets = [0, 32], sizes = [8, 32], strides = [1, 1]} : vector<8x128xf32> to vector<8x32xf32>
    %32 = vector.extract_strided_slice %3 {offsets = [0, 32], sizes = [8, 32], strides = [1, 1]} : vector<8x128xf32> to vector<8x32xf32>
    %33 = vector.extract_strided_slice %5 {offsets = [0, 32], sizes = [8, 32], strides = [1, 1]} : vector<8x128xf32> to vector<8x32xf32>
    %cst_19 = arith.constant dense<0.000000e+00> : vector<8x8xf32>
    %34 = tpu.matmul %31, %32, %cst_19 {dimension_numbers = #tpu.dot_dimension_numbers<[1], [1], [0], [0], [0, 0, 1, 0], [], []>} : vector<8x32xf32>, vector<8x32xf32>, vector<8x8xf32> -> vector<8x8xf32>
    %c0_i32_20 = arith.constant 0 : i32
    %35 = vector.broadcast %c0_i32_20 : i32 to vector<8x8xi32>
    %36 = arith.cmpi eq, %7, %35 : vector<8x8xi32>
    %cst_21 = arith.constant -1.000000e+20 : f32
    %37 = vector.broadcast %cst_21 : f32 to vector<8x8xf32>
    %38 = arith.select %36, %37, %34 : vector<8x8xi1>, vector<8x8xf32>
    %cst_22 = arith.constant 0.176776692 : f32
    %39 = vector.broadcast %cst_22 : f32 to vector<8x8xf32>
    %40 = arith.mulf %38, %39 : vector<8x8xf32>
    %cst_23 = arith.constant dense<0xFF800000> : vector<8xf32>
    %41 = vector.multi_reduction <maximumf>, %40, %cst_23 [1] : vector<8x8xf32> to vector<8xf32>
    %42 = vector.shape_cast %41 : vector<8xf32> to vector<8x1xf32>
    %43 = vector.broadcast %42 : vector<8x1xf32> to vector<8x8xf32>
    %44 = arith.subf %40, %43 : vector<8x8xf32>
    %45 = math.exp %44 : vector<8x8xf32>
    %cst_24 = arith.constant dense<0.000000e+00> : vector<8xf32>
    %46 = vector.multi_reduction <add>, %45, %cst_24 [1] : vector<8x8xf32> to vector<8xf32>
    %47 = vector.shape_cast %46 : vector<8xf32> to vector<8x1xf32>
    %48 = tpu.reciprocal %47 {approx = true} : vector<8x1xf32> -> vector<8x1xf32>
    %49 = vector.broadcast %48 : vector<8x1xf32> to vector<8x8xf32>
    %50 = arith.mulf %45, %49 : vector<8x8xf32>
    %cst_25 = arith.constant dense<0.000000e+00> : vector<8x32xf32>
    %51 = tpu.matmul %50, %33, %cst_25 {dimension_numbers = #tpu.dot_dimension_numbers<[1], [0], [0], [1], [0, 0, 1, 1], [], []>} : vector<8x8xf32>, vector<8x32xf32>, vector<8x32xf32> -> vector<8x32xf32>
    %c32 = arith.constant 32 : index
    %c0_26 = arith.constant 0 : index
    %52 = vector.load %arg5[%c32, %c0_26] : memref<128x128xf32, #tpu.memory_space<vmem>>, vector<32x128xf32>
    %cst_27 = arith.constant dense<0.000000e+00> : vector<8x128xf32>
    %53 = tpu.matmul %51, %52, %cst_27 {dimension_numbers = #tpu.dot_dimension_numbers<[1], [0], [0], [1], [0, 0, 1, 1], [], []>} : vector<8x32xf32>, vector<32x128xf32>, vector<8x128xf32> -> vector<8x128xf32>
    %54 = arith.addf %30, %53 : vector<8x128xf32>
    %55 = vector.extract_strided_slice %1 {offsets = [0, 64], sizes = [8, 32], strides = [1, 1]} : vector<8x128xf32> to vector<8x32xf32>
    %56 = vector.extract_strided_slice %3 {offsets = [0, 64], sizes = [8, 32], strides = [1, 1]} : vector<8x128xf32> to vector<8x32xf32>
    %57 = vector.extract_strided_slice %5 {offsets = [0, 64], sizes = [8, 32], strides = [1, 1]} : vector<8x128xf32> to vector<8x32xf32>
    %cst_28 = arith.constant dense<0.000000e+00> : vector<8x8xf32>
    %58 = tpu.matmul %55, %56, %cst_28 {dimension_numbers = #tpu.dot_dimension_numbers<[1], [1], [0], [0], [0, 0, 1, 0], [], []>} : vector<8x32xf32>, vector<8x32xf32>, vector<8x8xf32> -> vector<8x8xf32>
    %c0_i32_29 = arith.constant 0 : i32
    %59 = vector.broadcast %c0_i32_29 : i32 to vector<8x8xi32>
    %60 = arith.cmpi eq, %7, %59 : vector<8x8xi32>
    %cst_30 = arith.constant -1.000000e+20 : f32
    %61 = vector.broadcast %cst_30 : f32 to vector<8x8xf32>
    %62 = arith.select %60, %61, %58 : vector<8x8xi1>, vector<8x8xf32>
    %cst_31 = arith.constant 0.176776692 : f32
    %63 = vector.broadcast %cst_31 : f32 to vector<8x8xf32>
    %64 = arith.mulf %62, %63 : vector<8x8xf32>
    %cst_32 = arith.constant dense<0xFF800000> : vector<8xf32>
    %65 = vector.multi_reduction <maximumf>, %64, %cst_32 [1] : vector<8x8xf32> to vector<8xf32>
    %66 = vector.shape_cast %65 : vector<8xf32> to vector<8x1xf32>
    %67 = vector.broadcast %66 : vector<8x1xf32> to vector<8x8xf32>
    %68 = arith.subf %64, %67 : vector<8x8xf32>
    %69 = math.exp %68 : vector<8x8xf32>
    %cst_33 = arith.constant dense<0.000000e+00> : vector<8xf32>
    %70 = vector.multi_reduction <add>, %69, %cst_33 [1] : vector<8x8xf32> to vector<8xf32>
    %71 = vector.shape_cast %70 : vector<8xf32> to vector<8x1xf32>
    %72 = tpu.reciprocal %71 {approx = true} : vector<8x1xf32> -> vector<8x1xf32>
    %73 = vector.broadcast %72 : vector<8x1xf32> to vector<8x8xf32>
    %74 = arith.mulf %69, %73 : vector<8x8xf32>
    %cst_34 = arith.constant dense<0.000000e+00> : vector<8x32xf32>
    %75 = tpu.matmul %74, %57, %cst_34 {dimension_numbers = #tpu.dot_dimension_numbers<[1], [0], [0], [1], [0, 0, 1, 1], [], []>} : vector<8x8xf32>, vector<8x32xf32>, vector<8x32xf32> -> vector<8x32xf32>
    %c64 = arith.constant 64 : index
    %c0_35 = arith.constant 0 : index
    %76 = vector.load %arg5[%c64, %c0_35] : memref<128x128xf32, #tpu.memory_space<vmem>>, vector<32x128xf32>
    %cst_36 = arith.constant dense<0.000000e+00> : vector<8x128xf32>
    %77 = tpu.matmul %75, %76, %cst_36 {dimension_numbers = #tpu.dot_dimension_numbers<[1], [0], [0], [1], [0, 0, 1, 1], [], []>} : vector<8x32xf32>, vector<32x128xf32>, vector<8x128xf32> -> vector<8x128xf32>
    %78 = arith.addf %54, %77 : vector<8x128xf32>
    %79 = vector.extract_strided_slice %1 {offsets = [0, 96], sizes = [8, 32], strides = [1, 1]} : vector<8x128xf32> to vector<8x32xf32>
    %80 = vector.extract_strided_slice %3 {offsets = [0, 96], sizes = [8, 32], strides = [1, 1]} : vector<8x128xf32> to vector<8x32xf32>
    %81 = vector.extract_strided_slice %5 {offsets = [0, 96], sizes = [8, 32], strides = [1, 1]} : vector<8x128xf32> to vector<8x32xf32>
    %cst_37 = arith.constant dense<0.000000e+00> : vector<8x8xf32>
    %82 = tpu.matmul %79, %80, %cst_37 {dimension_numbers = #tpu.dot_dimension_numbers<[1], [1], [0], [0], [0, 0, 1, 0], [], []>} : vector<8x32xf32>, vector<8x32xf32>, vector<8x8xf32> -> vector<8x8xf32>
    %c0_i32_38 = arith.constant 0 : i32
    %83 = vector.broadcast %c0_i32_38 : i32 to vector<8x8xi32>
    %84 = arith.cmpi eq, %7, %83 : vector<8x8xi32>
    %cst_39 = arith.constant -1.000000e+20 : f32
    %85 = vector.broadcast %cst_39 : f32 to vector<8x8xf32>
    %86 = arith.select %84, %85, %82 : vector<8x8xi1>, vector<8x8xf32>
    %cst_40 = arith.constant 0.176776692 : f32
    %87 = vector.broadcast %cst_40 : f32 to vector<8x8xf32>
    %88 = arith.mulf %86, %87 : vector<8x8xf32>
    %cst_41 = arith.constant dense<0xFF800000> : vector<8xf32>
    %89 = vector.multi_reduction <maximumf>, %88, %cst_41 [1] : vector<8x8xf32> to vector<8xf32>
    %90 = vector.shape_cast %89 : vector<8xf32> to vector<8x1xf32>
    %91 = vector.broadcast %90 : vector<8x1xf32> to vector<8x8xf32>
    %92 = arith.subf %88, %91 : vector<8x8xf32>
    %93 = math.exp %92 : vector<8x8xf32>
    %cst_42 = arith.constant dense<0.000000e+00> : vector<8xf32>
    %94 = vector.multi_reduction <add>, %93, %cst_42 [1] : vector<8x8xf32> to vector<8xf32>
    %95 = vector.shape_cast %94 : vector<8xf32> to vector<8x1xf32>
    %96 = tpu.reciprocal %95 {approx = true} : vector<8x1xf32> -> vector<8x1xf32>
    %97 = vector.broadcast %96 : vector<8x1xf32> to vector<8x8xf32>
    %98 = arith.mulf %93, %97 : vector<8x8xf32>
    %cst_43 = arith.constant dense<0.000000e+00> : vector<8x32xf32>
    %99 = tpu.matmul %98, %81, %cst_43 {dimension_numbers = #tpu.dot_dimension_numbers<[1], [0], [0], [1], [0, 0, 1, 1], [], []>} : vector<8x8xf32>, vector<8x32xf32>, vector<8x32xf32> -> vector<8x32xf32>
    %c96 = arith.constant 96 : index
    %c0_44 = arith.constant 0 : index
    %100 = vector.load %arg5[%c96, %c0_44] : memref<128x128xf32, #tpu.memory_space<vmem>>, vector<32x128xf32>
    %cst_45 = arith.constant dense<0.000000e+00> : vector<8x128xf32>
    %101 = tpu.matmul %99, %100, %cst_45 {dimension_numbers = #tpu.dot_dimension_numbers<[1], [0], [0], [1], [0, 0, 1, 1], [], []>} : vector<8x32xf32>, vector<32x128xf32>, vector<8x128xf32> -> vector<8x128xf32>
    %102 = arith.addf %78, %101 : vector<8x128xf32>
    %c0_46 = arith.constant 0 : index
    %c0_47 = arith.constant 0 : index
    %103 = vector.load %arg6[%c0_46, %c0_47] : memref<1x128xf32, #tpu.memory_space<vmem>>, vector<1x128xf32>
    %104 = vector.broadcast %103 : vector<1x128xf32> to vector<8x128xf32>
    %105 = arith.addf %102, %104 : vector<8x128xf32>
    %106 = arith.addf %105, %1 : vector<8x128xf32>
    %cst_48 = arith.constant dense<0.000000e+00> : vector<8xf32>
    %107 = vector.multi_reduction <add>, %106, %cst_48 [1] : vector<8x128xf32> to vector<8xf32>
    %108 = vector.shape_cast %107 : vector<8xf32> to vector<8x1xf32>
    %cst_49 = arith.constant 1.280000e+02 : f32
    %109 = vector.broadcast %cst_49 : f32 to vector<8x1xf32>
    %110 = arith.divf %108, %109 : vector<8x1xf32>
    %111 = vector.broadcast %110 : vector<8x1xf32> to vector<8x128xf32>
    %112 = arith.subf %106, %111 : vector<8x128xf32>
    %113 = arith.mulf %112, %112 : vector<8x128xf32>
    %cst_50 = arith.constant dense<0.000000e+00> : vector<8xf32>
    %114 = vector.multi_reduction <add>, %113, %cst_50 [1] : vector<8x128xf32> to vector<8xf32>
    %115 = vector.shape_cast %114 : vector<8xf32> to vector<8x1xf32>
    %cst_51 = arith.constant 1.280000e+02 : f32
    %116 = vector.broadcast %cst_51 : f32 to vector<8x1xf32>
    %117 = arith.divf %115, %116 : vector<8x1xf32>
    %c0_52 = arith.constant 0 : index
    %c0_53 = arith.constant 0 : index
    %118 = vector.load %arg7[%c0_52, %c0_53] : memref<1x128xf32, #tpu.memory_space<vmem>>, vector<1x128xf32>
    %cst_54 = arith.constant 9.99999997E-7 : f32
    %119 = vector.broadcast %cst_54 : f32 to vector<8x1xf32>
    %120 = arith.addf %117, %119 : vector<8x1xf32>
    %121 = math.rsqrt %120 : vector<8x1xf32>
    %122 = vector.broadcast %121 : vector<8x1xf32> to vector<8x128xf32>
    %123 = arith.mulf %112, %122 : vector<8x128xf32>
    %124 = vector.broadcast %118 : vector<1x128xf32> to vector<8x128xf32>
    %125 = arith.mulf %124, %123 : vector<8x128xf32>
    %c0_55 = arith.constant 0 : index
    %c0_56 = arith.constant 0 : index
    %126 = vector.load %arg8[%c0_55, %c0_56] : memref<1x128xf32, #tpu.memory_space<vmem>>, vector<1x128xf32>
    %127 = vector.broadcast %126 : vector<1x128xf32> to vector<8x128xf32>
    %128 = arith.addf %125, %127 : vector<8x128xf32>
    %cst_57 = arith.constant 0.899999976 : f32
    %129 = vector.broadcast %cst_57 : f32 to vector<8x128xf32>
    %130 = arith.mulf %128, %129 : vector<8x128xf32>
    %c0_58 = arith.constant 0 : index
    %c0_59 = arith.constant 0 : index
    %c0_60 = arith.constant 0 : index
    %131 = vector.load %arg9[%c0_58, %c0_59, %c0_60] : memref<1x8x128xf32, #tpu.memory_space<vmem>>, vector<1x8x128xf32>
    %132 = vector.shape_cast %131 : vector<1x8x128xf32> to vector<8x128xf32>
    %133 = vector.shape_cast %130 : vector<8x128xf32> to vector<1x8x128xf32>
    tpu.vector_store %arg9[%c0_58, %c0_59, %c0_60], %133 {strides = array<i32>} : memref<1x8x128xf32, #tpu.memory_space<vmem>>, vector<1x8x128xf32>,
    return
  }
  func.func @transform_0(%arg0: i32) -> (i32, i32, i32) {
    %c0_i32 = arith.constant 0 : i32
    %c0_i32_0 = arith.constant 0 : i32
    %c0_i32_1 = arith.constant 0 : i32
    return %arg0, %c0_i32, %c0_i32_0 : i32, i32, i32
  }
  func.func @transform_1(%arg0: i32) -> (i32, i32, i32) {
    %c0_i32 = arith.constant 0 : i32
    %c0_i32_0 = arith.constant 0 : i32
    %c0_i32_1 = arith.constant 0 : i32
    return %arg0, %c0_i32, %c0_i32_0 : i32, i32, i32
  }
  func.func @transform_2(%arg0: i32) -> (i32, i32, i32) {
    %c0_i32 = arith.constant 0 : i32
    %c0_i32_0 = arith.constant 0 : i32
    %c0_i32_1 = arith.constant 0 : i32
    return %arg0, %c0_i32, %c0_i32_0 : i32, i32, i32
  }
  func.func @transform_3(%arg0: i32) -> (i32, i32, i32) {
    %c0_i32 = arith.constant 0 : i32
    %c0_i32_0 = arith.constant 0 : i32
    %c0_i32_1 = arith.constant 0 : i32
    %c0_i32_2 = arith.constant 0 : i32
    return %c0_i32, %c0_i32_0, %c0_i32_1 : i32, i32, i32
  }
  func.func @transform_4(%arg0: i32) -> (i32, i32) {
    %c0_i32 = arith.constant 0 : i32
    %c0_i32_0 = arith.constant 0 : i32
    %c0_i32_1 = arith.constant 0 : i32
    return %c0_i32, %c0_i32_0 : i32, i32
  }
  func.func @transform_5(%arg0: i32) -> (i32, i32) {
    %c0_i32 = arith.constant 0 : i32
    %c0_i32_0 = arith.constant 0 : i32
    %c0_i32_1 = arith.constant 0 : i32
    return %c0_i32, %c0_i32_0 : i32, i32
  }
  func.func @transform_6(%arg0: i32) -> (i32, i32) {
    %c0_i32 = arith.constant 0 : i32
    %c0_i32_0 = arith.constant 0 : i32
    %c0_i32_1 = arith.constant 0 : i32
    return %c0_i32, %c0_i32_0 : i32, i32
  }
  func.func @transform_7(%arg0: i32) -> (i32, i32) {
    %c0_i32 = arith.constant 0 : i32
    %c0_i32_0 = arith.constant 0 : i32
    %c0_i32_1 = arith.constant 0 : i32
    return %c0_i32, %c0_i32_0 : i32, i32
  }
  func.func @transform_8(%arg0: i32) -> (i32, i32, i32) {
    %c0_i32 = arith.constant 0 : i32
    %c0_i32_0 = arith.constant 0 : i32
    %c0_i32_1 = arith.constant 0 : i32
    return %arg0, %c0_i32, %c0_i32_0 : i32, i32, i32
  }
}

</mosaic_0001>

<llo_original>
// kernel: tpu_custom_call.1
$region0: #{tpu_custom_call.1}
  #allocation0 [shape = 'u32[]', space=smem, size = 0x4, offset = 0x4, fixed_abs, tag = 'smem constant byte address 0x4 - core index']
  #allocation1 [shape = 'u32[72,128]{1,0:T(1,128)}', space=vmem, size = 0x9000, scoped, tag = 'internal scratch']
  %s0 = inlined_call_operand.hbm [shape: f32[2,8,128], index: 0, kind: input, shape index: {}]
  %s1 = inlined_call_operand.hbm [shape: f32[2,8,128], index: 1, kind: input, shape index: {}]
  %s2 = inlined_call_operand.hbm [shape: f32[2,8,128], index: 2, kind: input, shape index: {}]
  %s3 = inlined_call_operand.hbm [shape: s32[1,8,8], index: 3, kind: input, shape index: {}]
  %s4 = inlined_call_operand.hbm [shape: f32[128,128], index: 4, kind: input, shape index: {}]
  %s5 = inlined_call_operand.vmem [shape: f32[1,128], index: 5, kind: input, shape index: {}]
  %s6 = inlined_call_operand.vmem [shape: f32[1,128], index: 6, kind: input, shape index: {}]
  %s7 = inlined_call_operand.vmem [shape: f32[1,128], index: 7, kind: input, shape index: {}]
  %s8 = inlined_call_operand.hbm [shape: f32[2,8,128], index: 8, kind: output, shape index: {}]
  %s9 = sld [smem:[#allocation0]]
  $region85: #{tpu_custom_call.1} parent=0
    _
  %s11 = ssub.s32 1, %s9
  %s12 = scalar_select 0, %s11, %s9
  $region1: #{tpu_custom_call.1} parent=0
    #allocation2 [shape = 'u8[8192]{0}', space=vmem, size = 0x2000, scoped, tag = 'input window, operand 0']
    #allocation3 [shape = 's32[2]{0}', space=sflag, size = 0x8, scoped, tag = 'scoped memory for tpu_custom_call.1']
    #allocation4 [shape = 's32[2]{0}', space=sflag, size = 0x8, scoped, tag = 'scoped memory for tpu_custom_call.1']
    #allocation5 [shape = 'u8[8192]{0}', space=vmem, size = 0x2000, scoped, tag = 'input window, operand 1']
    #allocation6 [shape = 's32[2]{0}', space=sflag, size = 0x8, scoped, tag = 'scoped memory for tpu_custom_call.1']
    #allocation7 [shape = 'u8[8192]{0}', space=vmem, size = 0x2000, scoped, tag = 'input window, operand 2']
    #allocation8 [shape = 'u8[4096]{0}', space=vmem, size = 0x1000, scoped, tag = 'input window, operand 3, single buffered']
    #allocation9 [shape = 's32[1]{0}', space=sflag, size = 0x4, scoped, tag = 'scoped memory for tpu_custom_call.1']
    #allocation10 [shape = 'u8[65536]{0}', space=vmem, size = 0x10000, scoped, tag = 'input window, operand 4, single buffered']
    #allocation11 [shape = 'u8[8192]{0}', space=vmem, size = 0x2000, scoped, tag = 'output window, operand 0']
    %13 = vsyncpa [#allocation3], 0
    %s14 = scalar_lea.sflag [#allocation3], 1
    %15 = vsyncpa %s14, 0
    %16 = vsyncpa [#allocation6], 0
    %s17 = scalar_lea.sflag [#allocation6], 1
    %18 = vsyncpa %s17, 0
    %19 = vsyncpa [#allocation9], 0
    %20 = vsyncpa [#allocation4], 0
    %s21 = scalar_lea.sflag [#allocation4], 1
    %22 = vsyncpa %s21, 0
    loop: start=0, step=1, limit=4
    $region2: #{tpu_custom_call.1} parent=1 // loop_pre_header
      _
    $region3: #{tpu_custom_call.1} parent=1 // loop_header
      %s24 = sphi 0, %s28
      %p25 = scmp.ge.s32.totalorder %s24, 4
      %s34 = sphi 0, %s36
      %s37 = sphi 0, %s34
      %s38 = sphi 0, %s37
      %s54 = sphi 0, %s38
      %s60 = sphi 0, %s62
      %s63 = sphi 0, %s60
      %s64 = sphi 0, %s63
      %s80 = sphi 0, %s64
      %s86 = sphi 0, %s88
      %s89 = sphi 0, %s86
      %s90 = sphi 0, %s89
      %s106 = sphi 0, %s90
      %s110 = sphi 0, %s110
      %s112 = sphi 0, %s110
      %s113 = sphi 0, %s112
      %s127 = sphi 0, %s113
      %s131 = sphi 0, %s131
      %s133 = sphi 0, %s131
      %s134 = sphi 0, %s133
      %s148 = sphi 0, %s134
      %s152 = sphi 0, %s152
      %s154 = sphi 0, %s152
      %s155 = sphi 0, %s154
      %s169 = sphi 0, %s155
      %s173 = sphi 0, %s173
      %s175 = sphi 0, %s173
      %s176 = sphi 0, %s175
      %s190 = sphi 0, %s176
      %s194 = sphi 0, %s194
      %s196 = sphi 0, %s194
      %s197 = sphi 0, %s196
      %s211 = sphi 0, %s197
      %s217 = sphi 0, %s219
      %s220 = sphi 0, %s217
      %s221 = sphi 0, %s220
      %s237 = sphi 0, %s221
    $region4: #{tpu_custom_call.1} parent=1 // loop_header_branch
      %27 = sbr.rel (%p25) target = $region8
    $region5: #{tpu_custom_call.1} parent=1 // loop_body
      %s29 = ssub.s32 %s24, 1
      %s30 = ssub.s32 %s24, 2
      %s31 = sadd.s32 %s24, 1
      %s32 = ssub.s32 %s24, %s31
      %p33 = scmp.eq.s32.totalorder %s32, 0
      %s35 = sadd.s32 %s34, 1
      %s36 = scalar_select %p33, %s34, %s35
      %p39 = pneg %p33
      %p40 = scmp.eq.s32.totalorder %s24, 1
      %p41 = por %p39, %p40
      %p42 = scmp.ne.s32.totalorder %s34, %s37
      %p43 = scmp.eq.s32.totalorder %s24, 0
      %p44 = por %p42, %p43
      %p45 = scmp.ne.s32.totalorder %s34, %s37
      %p46 = scmp.eq.s32.totalorder %s29, 1
      %p47 = por %p45, %p46
      %p48 = scmp.ne.s32.totalorder %s37, %s38
      %p49 = scmp.eq.s32.totalorder %s29, 0
      %p50 = por %p48, %p49
      %p51 = scmp.ne.s32.totalorder %s37, %s38
      %p52 = scmp.eq.s32.totalorder %s30, 1
      %p53 = por %p51, %p52
      %p55 = scmp.ne.s32.totalorder %s38, %s54
      %p56 = scmp.eq.s32.totalorder %s30, 0
      %p57 = por %p55, %p56
      %s58 = ssub.s32 %s24, %s31
      %p59 = scmp.eq.s32.totalorder %s58, 0
      %s61 = sadd.s32 %s60, 1
      %s62 = scalar_select %p59, %s60, %s61
      %p65 = pneg %p59
      %p66 = scmp.eq.s32.totalorder %s24, 1
      %p67 = por %p65, %p66
      %p68 = scmp.ne.s32.totalorder %s60, %s63
      %p69 = scmp.eq.s32.totalorder %s24, 0
      %p70 = por %p68, %p69
      %p71 = scmp.ne.s32.totalorder %s60, %s63
      %p72 = scmp.eq.s32.totalorder %s29, 1
      %p73 = por %p71, %p72
      %p74 = scmp.ne.s32.totalorder %s63, %s64
      %p75 = scmp.eq.s32.totalorder %s29, 0
      %p76 = por %p74, %p75
      %p77 = scmp.ne.s32.totalorder %s63, %s64
      %p78 = scmp.eq.s32.totalorder %s30, 1
      %p79 = por %p77, %p78
      %p81 = scmp.ne.s32.totalorder %s64, %s80
      %p82 = scmp.eq.s32.totalorder %s30, 0
      %p83 = por %p81, %p82
      %s84 = ssub.s32 %s24, %s31
      %p85 = scmp.eq.s32.totalorder %s84, 0
      %s87 = sadd.s32 %s86, 1
      %s88 = scalar_select %p85, %s86, %s87
      %p91 = pneg %p85
      %p92 = scmp.eq.s32.totalorder %s24, 1
      %p93 = por %p91, %p92
      %p94 = scmp.ne.s32.totalorder %s86, %s89
      %p95 = scmp.eq.s32.totalorder %s24, 0
      %p96 = por %p94, %p95
      %p97 = scmp.ne.s32.totalorder %s86, %s89
      %p98 = scmp.eq.s32.totalorder %s29, 1
      %p99 = por %p97, %p98
      %p100 = scmp.ne.s32.totalorder %s89, %s90
      %p101 = scmp.eq.s32.totalorder %s29, 0
      %p102 = por %p100, %p101
      %p103 = scmp.ne.s32.totalorder %s89, %s90
      %p104 = scmp.eq.s32.totalorder %s30, 1
      %p105 = por %p103, %p104
      %p107 = scmp.ne.s32.totalorder %s90, %s106
      %p108 = scmp.eq.s32.totalorder %s30, 0
      %p109 = por %p107, %p108
      %s111 = sadd.s32 %s110, 1
      %p114 = scmp.eq.s32.totalorder %s24, 1
      %p115 = scmp.ne.s32.totalorder %s110, %s112
      %p116 = scmp.eq.s32.totalorder %s24, 0
      %p117 = por %p115, %p116
      %p118 = scmp.ne.s32.totalorder %s110, %s112
      %p119 = scmp.eq.s32.totalorder %s29, 1
      %p120 = por %p118, %p119
      %p121 = scmp.ne.s32.totalorder %s112, %s113
      %p122 = scmp.eq.s32.totalorder %s29, 0
      %p123 = por %p121, %p122
      %p124 = scmp.ne.s32.totalorder %s112, %s113
      %p125 = scmp.eq.s32.totalorder %s30, 1
      %p126 = por %p124, %p125
      %p128 = scmp.ne.s32.totalorder %s113, %s127
      %p129 = scmp.eq.s32.totalorder %s30, 0
      %p130 = por %p128, %p129
      %s132 = sadd.s32 %s131, 1
      %p135 = scmp.eq.s32.totalorder %s24, 1
      %p136 = scmp.ne.s32.totalorder %s131, %s133
      %p137 = scmp.eq.s32.totalorder %s24, 0
      %p138 = por %p136, %p137
      %p139 = scmp.ne.s32.totalorder %s131, %s133
      %p140 = scmp.eq.s32.totalorder %s29, 1
      %p141 = por %p139, %p140
      %p142 = scmp.ne.s32.totalorder %s133, %s134
      %p143 = scmp.eq.s32.totalorder %s29, 0
      %p144 = por %p142, %p143
      %p145 = scmp.ne.s32.totalorder %s133, %s134
      %p146 = scmp.eq.s32.totalorder %s30, 1
      %p147 = por %p145, %p146
      %p149 = scmp.ne.s32.totalorder %s134, %s148
      %p150 = scmp.eq.s32.totalorder %s30, 0
      %p151 = por %p149, %p150
      %s153 = sadd.s32 %s152, 1
      %p156 = scmp.eq.s32.totalorder %s24, 1
      %p157 = scmp.ne.s32.totalorder %s152, %s154
      %p158 = scmp.eq.s32.totalorder %s24, 0
      %p159 = por %p157, %p158
      %p160 = scmp.ne.s32.totalorder %s152, %s154
      %p161 = scmp.eq.s32.totalorder %s29, 1
      %p162 = por %p160, %p161
      %p163 = scmp.ne.s32.totalorder %s154, %s155
      %p164 = scmp.eq.s32.totalorder %s29, 0
      %p165 = por %p163, %p164
      %p166 = scmp.ne.s32.totalorder %s154, %s155
      %p167 = scmp.eq.s32.totalorder %s30, 1
      %p168 = por %p166, %p167
      %p170 = scmp.ne.s32.totalorder %s155, %s169
      %p171 = scmp.eq.s32.totalorder %s30, 0
      %p172 = por %p170, %p171
      %s174 = sadd.s32 %s173, 1
      %p177 = scmp.eq.s32.totalorder %s24, 1
      %p178 = scmp.ne.s32.totalorder %s173, %s175
      %p179 = scmp.eq.s32.totalorder %s24, 0
      %p180 = por %p178, %p179
      %p181 = scmp.ne.s32.totalorder %s173, %s175
      %p182 = scmp.eq.s32.totalorder %s29, 1
      %p183 = por %p181, %p182
      %p184 = scmp.ne.s32.totalorder %s175, %s176
      %p185 = scmp.eq.s32.totalorder %s29, 0
      %p186 = por %p184, %p185
      %p187 = scmp.ne.s32.totalorder %s175, %s176
      %p188 = scmp.eq.s32.totalorder %s30, 1
      %p189 = por %p187, %p188
      %p191 = scmp.ne.s32.totalorder %s176, %s190
      %p192 = scmp.eq.s32.totalorder %s30, 0
      %p193 = por %p191, %p192
      %s195 = sadd.s32 %s194, 1
      %p198 = scmp.eq.s32.totalorder %s24, 1
      %p199 = scmp.ne.s32.totalorder %s194, %s196
      %p200 = scmp.eq.s32.totalorder %s24, 0
      %p201 = por %p199, %p200
      %p202 = scmp.ne.s32.totalorder %s194, %s196
      %p203 = scmp.eq.s32.totalorder %s29, 1
      %p204 = por %p202, %p203
      %p205 = scmp.ne.s32.totalorder %s196, %s197
      %p206 = scmp.eq.s32.totalorder %s29, 0
      %p207 = por %p205, %p206
      %p208 = scmp.ne.s32.totalorder %s196, %s197
      %p209 = scmp.eq.s32.totalorder %s30, 1
      %p210 = por %p208, %p209
      %p212 = scmp.ne.s32.totalorder %s197, %s211
      %p213 = scmp.eq.s32.totalorder %s30, 0
      %p214 = por %p212, %p213
      %s215 = ssub.s32 %s24, %s31
      %p216 = scmp.eq.s32.totalorder %s215, 0
      %s218 = sadd.s32 %s217, 1
      %s219 = scalar_select %p216, %s217, %s218
      %p222 = pneg %p216
      %p223 = scmp.eq.s32.totalorder %s24, 1
      %p224 = por %p222, %p223
      %p225 = scmp.ne.s32.totalorder %s217, %s220
      %p226 = scmp.eq.s32.totalorder %s24, 0
      %p227 = por %p225, %p226
      %p228 = scmp.ne.s32.totalorder %s217, %s220
      %p229 = scmp.eq.s32.totalorder %s29, 1
      %p230 = por %p228, %p229
      %p231 = scmp.ne.s32.totalorder %s220, %s221
      %p232 = scmp.eq.s32.totalorder %s29, 0
      %p233 = por %p231, %p232
      %p234 = scmp.ne.s32.totalorder %s220, %s221
      %p235 = scmp.eq.s32.totalorder %s30, 1
      %p236 = por %p234, %p235
      %p238 = scmp.ne.s32.totalorder %s221, %s237
      %p239 = scmp.eq.s32.totalorder %s30, 0
      %p240 = por %p238, %p239
      %p241 = scmp.le.s32.totalorder 1, %s24
      %p242 = scmp.lt.s32.totalorder %s24, 3
      %p243 = pnand %p241, %p242
      %p244 = pneg %p243
      // Predicated region
      $region9: #{tpu_custom_call.1} parent=5 // pred_check
        _
      $region10: #{tpu_custom_call.1} parent=5 // pred_check_branch
        %246 = sbr.rel (%p243) target = $region12
      $region11: #{tpu_custom_call.1} parent=5 // pred_region
        %s247 = ssub.s32 %s24, 1
        // Predicated region
        $region13: #{tpu_custom_call.1} parent=11 // pred_check
          %p248 = pneg %p123
        $region14: #{tpu_custom_call.1} parent=11 // pred_check_branch
          %250 = sbr.rel (%p248) target = $region16
        $region15: #{tpu_custom_call.1} parent=11 // pred_region
          %252 = vsyncadd [#allocation9], 0
          %s254 = sshll.u32 %s3, 4
          %s255 = int_to_ptr.hbm [resolvable:$true] %s254
          %s256 = sshll.u32 [#allocation8], 4
          %s257 = int_to_ptr.vmem [resolvable:$true] %s256
          %259 = dma.hbm_to_vmem [thread:$0]  %s255, 128, %s257, [#allocation9]
        $region16: #{tpu_custom_call.1} parent=11 // pred_fallthru
          _
        // Predicated region
        $region17: #{tpu_custom_call.1} parent=11 // pred_check
          %p260 = pneg %p144
        $region18: #{tpu_custom_call.1} parent=11 // pred_check_branch
          %262 = sbr.rel (%p260) target = $region20
        $region19: #{tpu_custom_call.1} parent=11 // pred_region
          %264 = vsyncadd [#allocation9], 0
          %s265 = sshll.u32 %s4, 4
          %s266 = int_to_ptr.hbm [resolvable:$true] %s265
          %s267 = sshll.u32 [#allocation10], 4
          %s268 = int_to_ptr.vmem [resolvable:$true] %s267
          %273 = dma.hbm_to_vmem [thread:$0]  %s266, 2048, %s268, [#allocation9], 128, 128, 8
        $region20: #{tpu_custom_call.1} parent=11 // pred_fallthru
          _
        // Predicated region
        $region21: #{tpu_custom_call.1} parent=11 // pred_check
          %p274 = pneg %p165
        $region22: #{tpu_custom_call.1} parent=11 // pred_check_branch
          %276 = sbr.rel (%p274) target = $region24
        $region23: #{tpu_custom_call.1} parent=11 // pred_region
          _
        $region24: #{tpu_custom_call.1} parent=11 // pred_fallthru
          _
        // Predicated region
        $region25: #{tpu_custom_call.1} parent=11 // pred_check
          %p277 = pneg %p186
        $region26: #{tpu_custom_call.1} parent=11 // pred_check_branch
          %279 = sbr.rel (%p277) target = $region28
        $region27: #{tpu_custom_call.1} parent=11 // pred_region
          _
        $region28: #{tpu_custom_call.1} parent=11 // pred_fallthru
          _
        // Predicated region
        $region29: #{tpu_custom_call.1} parent=11 // pred_check
          %p280 = pneg %p207
        $region30: #{tpu_custom_call.1} parent=11 // pred_check_branch
          %282 = sbr.rel (%p280) target = $region32
        $region31: #{tpu_custom_call.1} parent=11 // pred_region
          _
        $region32: #{tpu_custom_call.1} parent=11 // pred_fallthru
          _
      $region12: #{tpu_custom_call.1} parent=5 // pred_fallthru
        _
      %p283 = scmp.lt.s32.totalorder %s24, 2
      // Predicated region
      $region33: #{tpu_custom_call.1} parent=5 // pred_check
        %p284 = pneg %p283
      $region34: #{tpu_custom_call.1} parent=5 // pred_check_branch
        %286 = sbr.rel (%p284) target = $region36
      $region35: #{tpu_custom_call.1} parent=5 // pred_region
        // Predicated region
        $region37: #{tpu_custom_call.1} parent=35 // pred_check
          %p287 = pneg %p44
        $region38: #{tpu_custom_call.1} parent=35 // pred_check_branch
          %289 = sbr.rel (%p287) target = $region40
        $region39: #{tpu_custom_call.1} parent=35 // pred_region
          %s290 = sand.u32 %s34, 1
          %s291 = scalar_lea.sflag [#allocation3], %s290
          %s292 = sand.u32 %s34, 1
          %s293 = smul.addr %s292, 8
          %s294 = scalar_lea.vmem [#allocation2], %s293
          %296 = vsyncadd %s291, 0
          %s297 = smul.addr %s24, 8
          %s298 = scalar_lea.hbm %s0, %s297
          %s300 = sshll.u32 %s298, 4
          %s301 = int_to_ptr.hbm [resolvable:$true] %s300
          %s302 = sshll.u32 %s294, 4
          %s303 = int_to_ptr.vmem [resolvable:$true] %s302
          %305 = dma.hbm_to_vmem [thread:$0]  %s301, 128, %s303, %s291
        $region40: #{tpu_custom_call.1} parent=35 // pred_fallthru
          _
        // Predicated region
        $region41: #{tpu_custom_call.1} parent=35 // pred_check
          %p306 = pneg %p70
        $region42: #{tpu_custom_call.1} parent=35 // pred_check_branch
          %308 = sbr.rel (%p306) target = $region44
        $region43: #{tpu_custom_call.1} parent=35 // pred_region
          %s309 = sand.u32 %s24, 1
          %s310 = scalar_lea.sflag [#allocation6], %s309
          %s311 = sand.u32 %s60, 1
          %s312 = smul.addr %s311, 8
          %s313 = scalar_lea.vmem [#allocation5], %s312
          %315 = vsyncadd %s310, 0
          %s316 = smul.addr %s24, 8
          %s317 = scalar_lea.hbm %s1, %s316
          %s319 = sshll.u32 %s317, 4
          %s320 = int_to_ptr.hbm [resolvable:$true] %s319
          %s321 = sshll.u32 %s313, 4
          %s322 = int_to_ptr.vmem [resolvable:$true] %s321
          %324 = dma.hbm_to_vmem [thread:$0]  %s320, 128, %s322, %s310
        $region44: #{tpu_custom_call.1} parent=35 // pred_fallthru
          _
        // Predicated region
        $region45: #{tpu_custom_call.1} parent=35 // pred_check
          %p325 = pneg %p96
        $region46: #{tpu_custom_call.1} parent=35 // pred_check_branch
          %327 = sbr.rel (%p325) target = $region48
        $region47: #{tpu_custom_call.1} parent=35 // pred_region
          %s328 = sand.u32 %s24, 1
          %s329 = scalar_lea.sflag [#allocation6], %s328
          %s330 = sand.u32 %s86, 1
          %s331 = smul.addr %s330, 8
          %s332 = scalar_lea.vmem [#allocation7], %s331
          %334 = vsyncadd %s329, 0
          %s335 = smul.addr %s24, 8
          %s336 = scalar_lea.hbm %s2, %s335
          %s338 = sshll.u32 %s336, 4
          %s339 = int_to_ptr.hbm [resolvable:$true] %s338
          %s340 = sshll.u32 %s332, 4
          %s341 = int_to_ptr.vmem [resolvable:$true] %s340
          %343 = dma.hbm_to_vmem [thread:$0]  %s339, 128, %s341, %s329
        $region48: #{tpu_custom_call.1} parent=35 // pred_fallthru
          _
      $region36: #{tpu_custom_call.1} parent=5 // pred_fallthru
        _
      %p344 = scmp.le.s32.totalorder 1, %s24
      %p345 = scmp.lt.s32.totalorder %s24, 3
      %p346 = pnand %p344, %p345
      %p347 = pneg %p346
      // Predicated region
      $region49: #{tpu_custom_call.1} parent=5 // pred_check
        _
      $region50: #{tpu_custom_call.1} parent=5 // pred_check_branch
        %349 = sbr.rel (%p346) target = $region52
      $region51: #{tpu_custom_call.1} parent=5 // pred_region
        %s350 = ssub.s32 %s24, 1
        %s351 = sand.u32 %s37, 1
        %s352 = scalar_lea.sflag [#allocation3], %s351
        %s353 = sand.u32 %s37, 1
        %s354 = smul.addr %s353, 8
        %s355 = scalar_lea.vmem [#allocation2], %s354
        // Predicated region
        $region53: #{tpu_custom_call.1} parent=51 // pred_check
          %p356 = pneg %p50
        $region54: #{tpu_custom_call.1} parent=51 // pred_check_branch
          %358 = sbr.rel (%p356) target = $region56
        $region55: #{tpu_custom_call.1} parent=51 // pred_region
          %360 = dma.done %s352, 128
        $region56: #{tpu_custom_call.1} parent=51 // pred_fallthru
          _
        %s361 = sand.u32 %s29, 1
        %s362 = scalar_lea.sflag [#allocation6], %s361
        %s363 = sand.u32 %s63, 1
        %s364 = smul.addr %s363, 8
        %s365 = scalar_lea.vmem [#allocation5], %s364
        // Predicated region
        $region57: #{tpu_custom_call.1} parent=51 // pred_check
          %p366 = pneg %p76
        $region58: #{tpu_custom_call.1} parent=51 // pred_check_branch
          %368 = sbr.rel (%p366) target = $region60
        $region59: #{tpu_custom_call.1} parent=51 // pred_region
          %370 = dma.done %s362, 128
        $region60: #{tpu_custom_call.1} parent=51 // pred_fallthru
          _
        %s371 = sand.u32 %s29, 1
        %s372 = scalar_lea.sflag [#allocation6], %s371
        %s373 = sand.u32 %s89, 1
        %s374 = smul.addr %s373, 8
        %s375 = scalar_lea.vmem [#allocation7], %s374
        // Predicated region
        $region61: #{tpu_custom_call.1} parent=51 // pred_check
          %p376 = pneg %p102
        $region62: #{tpu_custom_call.1} parent=51 // pred_check_branch
          %378 = sbr.rel (%p376) target = $region64
        $region63: #{tpu_custom_call.1} parent=51 // pred_region
          %380 = dma.done %s372, 128
        $region64: #{tpu_custom_call.1} parent=51 // pred_fallthru
          _
        // Predicated region
        $region65: #{tpu_custom_call.1} parent=51 // pred_check
          %p381 = pneg %p123
        $region66: #{tpu_custom_call.1} parent=51 // pred_check_branch
          %383 = sbr.rel (%p381) target = $region68
        $region67: #{tpu_custom_call.1} parent=51 // pred_region
          %385 = dma.done [#allocation9], 128
        $region68: #{tpu_custom_call.1} parent=51 // pred_fallthru
          _
        // Predicated region
        $region69: #{tpu_custom_call.1} parent=51 // pred_check
          %p386 = pneg %p144
        $region70: #{tpu_custom_call.1} parent=51 // pred_check_branch
          %388 = sbr.rel (%p386) target = $region72
        $region71: #{tpu_custom_call.1} parent=51 // pred_region
          %390 = dma.done [#allocation9], 2048
        $region72: #{tpu_custom_call.1} parent=51 // pred_fallthru
          _
        %s391 = sand.u32 %s37, 1
        %s392 = scalar_lea.sflag [#allocation3], %s391
        %s393 = sand.u32 %s37, 1
        %s394 = smul.addr %s393, 8
        %s395 = scalar_lea.vmem [#allocation2], %s394
        %p396 = pneg %p50
        %p397 = pneg %p47
        %s398 = sand.u32 %s29, 1
        %s399 = scalar_lea.sflag [#allocation6], %s398
        %s400 = sand.u32 %s63, 1
        %s401 = smul.addr %s400, 8
        %s402 = scalar_lea.vmem [#allocation5], %s401
        %p403 = pneg %p76
        %p404 = pneg %p73
        %s405 = sand.u32 %s29, 1
        %s406 = scalar_lea.sflag [#allocation6], %s405
        %s407 = sand.u32 %s89, 1
        %s408 = smul.addr %s407, 8
        %s409 = scalar_lea.vmem [#allocation7], %s408
        %p410 = pneg %p102
        %p411 = pneg %p99
        %p412 = pneg %p123
        %p413 = pneg %p120
        %p414 = pneg %p144
        %p415 = pneg %p141
        %p416 = pneg %p165
        %p417 = pneg %p162
        %p418 = pneg %p186
        %p419 = pneg %p183
        %p420 = pneg %p207
        %p421 = pneg %p204
        %p422 = pneg %p233
        %p423 = pneg %p230
        %s424 = sand.u32 %s220, 1
        %s425 = scalar_lea.sflag [#allocation4], %s424
        %s426 = sand.u32 %s220, 1
        %s427 = smul.addr %s426, 8
        %s428 = scalar_lea.vmem [#allocation11], %s427
        %v429 = vld [vmem:[%s355] sm:$0xff]
        %v430 = vld [vmem:[%s365] sm:$0xff]
        %v431 = vld [vmem:[%s375] sm:$0xff]
        %v432 = vld [vmem:[#allocation8] sm:$0xff]
        %vm433 = vcmask 261120
        %v435 = vsel %vm433, %v429, 0
        %v438 = vsel %vm433, %v430, 0
        %440 = vmatpush.xpose.msra.mxu0 0.0
        %441 = vmatpush.xpose.msra.mxu0 0.0
        %442 = vmatpush.xpose.msra.mxu0 0.0
        %443 = vmatpush.xpose.msra.mxu0 0.0
        %444 = vmatpush.xpose.msra.mxu0 0.0
        %445 = vmatpush.xpose.msra.mxu0 0.0
        %446 = vmatpush.xpose.msra.mxu0 0.0
        %447 = vmatpush.xpose.msra.mxu0 0.0
        %448 = vmatpush.xpose.msra.mxu0 0.0
        %449 = vmatpush.xpose.msra.mxu0 0.0
        %450 = vmatpush.xpose.msra.mxu0 0.0
        %451 = vmatpush.xpose.msra.mxu0 0.0
        %452 = vmatpush.xpose.msra.mxu0 0.0
        %453 = vmatpush.xpose.msra.mxu0 0.0
        %454 = vmatpush.xpose.msra.mxu0 0.0
        %455 = vmatpush.xpose.msra.mxu0 %v438
        %456 = vmatmul.f32.gmra.mxu0 %v435
        %v457 = vpop.f32.mrf.mxu0
        %v458 = vadd.f32 0.0, %v457
        %459 = vdwg.mxu0
        %vm460 = vcmp.eq.s32.totalorder %v432, 0
        %v461 = vsel %vm460, -1e+20, %v458
        %v462 = vmul.f32 %v461, 0.17677669
        %vm463 = vcmask 64512
        %v464 = vsel %vm463, %v462, -inf
        %465 = vmax.xlane.f32.xlu0 %v464
        %v466 = vpop.xlane.xlu0 %465
        %v467 = vsub.f32 %v462, %v466
        %v468 = vmul.f32 %v467, 1.442695
        %v469 = vpow.pop %v468
        %v470 = vsel %vm463, %v469, 0.0
        %471 = vadd.xlane.f32.xlu0 %v470
        %v472 = vpop.xlane.xlu0 %471
        %v473 = vrcp.pop %v472
        %v474 = vmul.f32 %v469, %v473
        %v476 = vsel %vm463, %v474, 0
        %478 = vmatpush.msra.mxu0 0.0
        %479 = vmatpush.msra.mxu0 0.0
        %480 = vmatpush.msra.mxu0 0.0
        %481 = vmatpush.msra.mxu0 0.0
        %482 = vmatpush.msra.mxu0 0.0
        %483 = vmatpush.msra.mxu0 0.0
        %484 = vmatpush.msra.mxu0 0.0
        %485 = vmatpush.msra.mxu0 0.0
        %486 = vmatpush.msra.mxu0 0.0
        %487 = vmatpush.msra.mxu0 0.0
        %488 = vmatpush.msra.mxu0 0.0
        %489 = vmatpush.msra.mxu0 0.0
        %490 = vmatpush.msra.mxu0 0.0
        %491 = vmatpush.msra.mxu0 0.0
        %492 = vmatpush.msra.mxu0 0.0
        %493 = vmatpush.msra.mxu0 %v431
        %494 = vmatmul.f32.gmra.mxu0 %v476
        %v495 = vpop.f32.mrf.mxu0
        %v496 = vadd.f32 0.0, %v495
        %497 = vdwg.mxu0
        %v498 = vld [vmem:[#allocation10] sm:$0xff]
        %v499 = vld [vmem:[#allocation10 + $0x8] sm:$0xff]
        %v500 = vld [vmem:[#allocation10 + $0x10] sm:$0xff]
        %v501 = vld [vmem:[#allocation10 + $0x18] sm:$0xff]
        %502 = vrot.lane.b32.xlu0 %v429, 96
        %v503 = vpop.permute.xlu0 %502
        %504 = vrot.lane.b32.xlu0 %v430, 96
        %v505 = vpop.permute.xlu0 %504
        %v506 = vsel %vm433, %v503, 0
        %v508 = vsel %vm433, %v505, 0
        %510 = vmatpush.xpose.msra.mxu0 0.0
        %511 = vmatpush.xpose.msra.mxu0 0.0
        %512 = vmatpush.xpose.msra.mxu0 0.0
        %513 = vmatpush.xpose.msra.mxu0 0.0
        %514 = vmatpush.xpose.msra.mxu0 0.0
        %515 = vmatpush.xpose.msra.mxu0 0.0
        %516 = vmatpush.xpose.msra.mxu0 0.0
        %517 = vmatpush.xpose.msra.mxu0 0.0
        %518 = vmatpush.xpose.msra.mxu0 0.0
        %519 = vmatpush.xpose.msra.mxu0 0.0
        %520 = vmatpush.xpose.msra.mxu0 0.0
        %521 = vmatpush.xpose.msra.mxu0 0.0
        %522 = vmatpush.xpose.msra.mxu0 0.0
        %523 = vmatpush.xpose.msra.mxu0 0.0
        %524 = vmatpush.xpose.msra.mxu0 0.0
        %525 = vmatpush.xpose.msra.mxu0 %v508
        %526 = vmatmul.f32.gmra.mxu0 %v506
        %v527 = vpop.f32.mrf.mxu0
        %v528 = vadd.f32 0.0, %v527
        %529 = vdwg.mxu0
        %v530 = vsel %vm460, -1e+20, %v528
        %v531 = vmul.f32 %v530, 0.17677669
        %v532 = vsel %vm463, %v531, -inf
        %533 = vmax.xlane.f32.xlu0 %v532
        %v534 = vpop.xlane.xlu0 %533
        %v535 = vsub.f32 %v531, %v534
        %v536 = vmul.f32 %v535, 1.442695
        %v537 = vpow.pop %v536
        %v538 = vsel %vm463, %v537, 0.0
        %539 = vadd.xlane.f32.xlu0 %v538
        %v540 = vpop.xlane.xlu0 %539
        %v541 = vrcp.pop %v540
        %v542 = vmul.f32 %v537, %v541
        %544 = vrot.lane.b32.xlu0 %v431, 96
        %v545 = vpop.permute.xlu0 %544
        %v548 = vsel %vm463, %v542, 0
        %550 = vmatpush.msra.mxu0 0.0
        %551 = vmatpush.msra.mxu0 0.0
        %552 = vmatpush.msra.mxu0 0.0
        %553 = vmatpush.msra.mxu0 0.0
        %554 = vmatpush.msra.mxu0 0.0
        %555 = vmatpush.msra.mxu0 0.0
        %556 = vmatpush.msra.mxu0 0.0
        %557 = vmatpush.msra.mxu0 0.0
        %558 = vmatpush.msra.mxu0 0.0
        %559 = vmatpush.msra.mxu0 0.0
        %560 = vmatpush.msra.mxu0 0.0
        %561 = vmatpush.msra.mxu0 0.0
        %562 = vmatpush.msra.mxu0 0.0
        %563 = vmatpush.msra.mxu0 0.0
        %564 = vmatpush.msra.mxu0 0.0
        %565 = vmatpush.msra.mxu0 %v545
        %566 = vmatmul.f32.gmra.mxu0 %v548
        %v567 = vpop.f32.mrf.mxu0
        %v568 = vadd.f32 0.0, %v567
        %569 = vdwg.mxu0
        %v570 = vld [vmem:[#allocation10 + $0x20] sm:$0xff]
        %v571 = vld [vmem:[#allocation10 + $0x28] sm:$0xff]
        %v572 = vld [vmem:[#allocation10 + $0x30] sm:$0xff]
        %v573 = vld [vmem:[#allocation10 + $0x38] sm:$0xff]
        %v575 = vsel %vm433, %v568, 0
        %577 = vmatpush.msra.mxu0 0.0
        %578 = vmatpush.msra.mxu0 0.0
        %579 = vmatpush.msra.mxu0 0.0
        %580 = vmatpush.msra.mxu0 0.0
        %581 = vmatpush.msra.mxu0 0.0
        %582 = vmatpush.msra.mxu0 0.0
        %583 = vmatpush.msra.mxu0 0.0
        %584 = vmatpush.msra.mxu0 0.0
        %585 = vmatpush.msra.mxu0 0.0
        %586 = vmatpush.msra.mxu0 0.0
        %587 = vmatpush.msra.mxu0 0.0
        %588 = vmatpush.msra.mxu0 0.0
        %589 = vmatpush.msra.mxu0 %v573
        %590 = vmatpush.msra.mxu0 %v572
        %591 = vmatpush.msra.mxu0 %v571
        %592 = vmatpush.msra.mxu0 %v570
        %593 = vmatmul.f32.gmra.mxu0 %v575
        %v594 = vpop.f32.mrf.mxu0
        %v595 = vadd.f32 0.0, %v594
        %596 = vdwg.mxu0
        %v598 = vsel %vm433, %v496, 0
        %600 = vmatpush.msra.mxu0 0.0
        %601 = vmatpush.msra.mxu0 0.0
        %602 = vmatpush.msra.mxu0 0.0
        %603 = vmatpush.msra.mxu0 0.0
        %604 = vmatpush.msra.mxu0 0.0
        %605 = vmatpush.msra.mxu0 0.0
        %606 = vmatpush.msra.mxu0 0.0
        %607 = vmatpush.msra.mxu0 0.0
        %608 = vmatpush.msra.mxu0 0.0
        %609 = vmatpush.msra.mxu0 0.0
        %610 = vmatpush.msra.mxu0 0.0
        %611 = vmatpush.msra.mxu0 0.0
        %612 = vmatpush.msra.mxu0 %v501
        %613 = vmatpush.msra.mxu0 %v500
        %614 = vmatpush.msra.mxu0 %v499
        %615 = vmatpush.msra.mxu0 %v498
        %616 = vmatmul.f32.gmra.mxu0 %v598
        %v617 = vpop.f32.mrf.mxu0
        %v618 = vadd.f32 %v595, %v617
        %619 = vdwg.mxu0
        %620 = vrot.lane.b32.xlu0 %v429, 64
        %v621 = vpop.permute.xlu0 %620
        %622 = vrot.lane.b32.xlu0 %v430, 64
        %v623 = vpop.permute.xlu0 %622
        %v624 = vsel %vm433, %v621, 0
        %v626 = vsel %vm433, %v623, 0
        %628 = vmatpush.xpose.msra.mxu0 0.0
        %629 = vmatpush.xpose.msra.mxu0 0.0
        %630 = vmatpush.xpose.msra.mxu0 0.0
        %631 = vmatpush.xpose.msra.mxu0 0.0
        %632 = vmatpush.xpose.msra.mxu0 0.0
        %633 = vmatpush.xpose.msra.mxu0 0.0
        %634 = vmatpush.xpose.msra.mxu0 0.0
        %635 = vmatpush.xpose.msra.mxu0 0.0
        %636 = vmatpush.xpose.msra.mxu0 0.0
        %637 = vmatpush.xpose.msra.mxu0 0.0
        %638 = vmatpush.xpose.msra.mxu0 0.0
        %639 = vmatpush.xpose.msra.mxu0 0.0
        %640 = vmatpush.xpose.msra.mxu0 0.0
        %641 = vmatpush.xpose.msra.mxu0 0.0
        %642 = vmatpush.xpose.msra.mxu0 0.0
        %643 = vmatpush.xpose.msra.mxu0 %v626
        %644 = vmatmul.f32.gmra.mxu0 %v624
        %v645 = vpop.f32.mrf.mxu0
        %v646 = vadd.f32 0.0, %v645
        %647 = vdwg.mxu0
        %v648 = vsel %vm460, -1e+20, %v646
        %v649 = vmul.f32 %v648, 0.17677669
        %v650 = vsel %vm463, %v649, -inf
        %651 = vmax.xlane.f32.xlu0 %v650
        %v652 = vpop.xlane.xlu0 %651
        %v653 = vsub.f32 %v649, %v652
        %v654 = vmul.f32 %v653, 1.442695
        %v655 = vpow.pop %v654
        %v656 = vsel %vm463, %v655, 0.0
        %657 = vadd.xlane.f32.xlu0 %v656
        %v658 = vpop.xlane.xlu0 %657
        %v659 = vrcp.pop %v658
        %v660 = vmul.f32 %v655, %v659
        %661 = vrot.lane.b32.xlu0 %v431, 64
        %v662 = vpop.permute.xlu0 %661
        %v665 = vsel %vm463, %v660, 0
        %667 = vmatpush.msra.mxu0 0.0
        %668 = vmatpush.msra.mxu0 0.0
        %669 = vmatpush.msra.mxu0 0.0
        %670 = vmatpush.msra.mxu0 0.0
        %671 = vmatpush.msra.mxu0 0.0
        %672 = vmatpush.msra.mxu0 0.0
        %673 = vmatpush.msra.mxu0 0.0
        %674 = vmatpush.msra.mxu0 0.0
        %675 = vmatpush.msra.mxu0 0.0
        %676 = vmatpush.msra.mxu0 0.0
        %677 = vmatpush.msra.mxu0 0.0
        %678 = vmatpush.msra.mxu0 0.0
        %679 = vmatpush.msra.mxu0 0.0
        %680 = vmatpush.msra.mxu0 0.0
        %681 = vmatpush.msra.mxu0 0.0
        %682 = vmatpush.msra.mxu0 %v662
        %683 = vmatmul.f32.gmra.mxu0 %v665
        %v684 = vpop.f32.mrf.mxu0
        %v685 = vadd.f32 0.0, %v684
        %686 = vdwg.mxu0
        %v687 = vld [vmem:[#allocation10 + $0x40] sm:$0xff]
        %v688 = vld [vmem:[#allocation10 + $0x48] sm:$0xff]
        %v689 = vld [vmem:[#allocation10 + $0x50] sm:$0xff]
        %v690 = vld [vmem:[#allocation10 + $0x58] sm:$0xff]
        %v692 = vsel %vm433, %v685, 0
        %694 = vmatpush.msra.mxu0 0.0
        %695 = vmatpush.msra.mxu0 0.0
        %696 = vmatpush.msra.mxu0 0.0
        %697 = vmatpush.msra.mxu0 0.0
        %698 = vmatpush.msra.mxu0 0.0
        %699 = vmatpush.msra.mxu0 0.0
        %700 = vmatpush.msra.mxu0 0.0
        %701 = vmatpush.msra.mxu0 0.0
        %702 = vmatpush.msra.mxu0 0.0
        %703 = vmatpush.msra.mxu0 0.0
        %704 = vmatpush.msra.mxu0 0.0
        %705 = vmatpush.msra.mxu0 0.0
        %706 = vmatpush.msra.mxu0 %v690
        %707 = vmatpush.msra.mxu0 %v689
        %708 = vmatpush.msra.mxu0 %v688
        %709 = vmatpush.msra.mxu0 %v687
        %710 = vmatmul.f32.gmra.mxu0 %v692
        %v711 = vpop.f32.mrf.mxu0
        %v712 = vadd.f32 0.0, %v711
        %713 = vdwg.mxu0
        %v714 = vadd.f32 %v618, %v712
        %715 = vrot.lane.b32.xlu0 %v429, 32
        %v716 = vpop.permute.xlu0 %715
        %717 = vrot.lane.b32.xlu0 %v430, 32
        %v718 = vpop.permute.xlu0 %717
        %v719 = vsel %vm433, %v716, 0
        %v721 = vsel %vm433, %v718, 0
        %723 = vmatpush.xpose.msra.mxu0 0.0
        %724 = vmatpush.xpose.msra.mxu0 0.0
        %725 = vmatpush.xpose.msra.mxu0 0.0
        %726 = vmatpush.xpose.msra.mxu0 0.0
        %727 = vmatpush.xpose.msra.mxu0 0.0
        %728 = vmatpush.xpose.msra.mxu0 0.0
        %729 = vmatpush.xpose.msra.mxu0 0.0
        %730 = vmatpush.xpose.msra.mxu0 0.0
        %731 = vmatpush.xpose.msra.mxu0 0.0
        %732 = vmatpush.xpose.msra.mxu0 0.0
        %733 = vmatpush.xpose.msra.mxu0 0.0
        %734 = vmatpush.xpose.msra.mxu0 0.0
        %735 = vmatpush.xpose.msra.mxu0 0.0
        %736 = vmatpush.xpose.msra.mxu0 0.0
        %737 = vmatpush.xpose.msra.mxu0 0.0
        %738 = vmatpush.xpose.msra.mxu0 %v721
        %739 = vmatmul.f32.gmra.mxu0 %v719
        %v740 = vpop.f32.mrf.mxu0
        %v741 = vadd.f32 0.0, %v740
        %742 = vdwg.mxu0
        %v743 = vsel %vm460, -1e+20, %v741
        %v744 = vmul.f32 %v743, 0.17677669
        %v745 = vsel %vm463, %v744, -inf
        %746 = vmax.xlane.f32.xlu0 %v745
        %v747 = vpop.xlane.xlu0 %746
        %v748 = vsub.f32 %v744, %v747
        %v749 = vmul.f32 %v748, 1.442695
        %v750 = vpow.pop %v749
        %v751 = vsel %vm463, %v750, 0.0
        %752 = vadd.xlane.f32.xlu0 %v751
        %v753 = vpop.xlane.xlu0 %752
        %v754 = vrcp.pop %v753
        %v755 = vmul.f32 %v750, %v754
        %756 = vrot.lane.b32.xlu0 %v431, 32
        %v757 = vpop.permute.xlu0 %756
        %v760 = vsel %vm463, %v755, 0
        %762 = vmatpush.msra.mxu0 0.0
        %763 = vmatpush.msra.mxu0 0.0
        %764 = vmatpush.msra.mxu0 0.0
        %765 = vmatpush.msra.mxu0 0.0
        %766 = vmatpush.msra.mxu0 0.0
        %767 = vmatpush.msra.mxu0 0.0
        %768 = vmatpush.msra.mxu0 0.0
        %769 = vmatpush.msra.mxu0 0.0
        %770 = vmatpush.msra.mxu0 0.0
        %771 = vmatpush.msra.mxu0 0.0
        %772 = vmatpush.msra.mxu0 0.0
        %773 = vmatpush.msra.mxu0 0.0
        %774 = vmatpush.msra.mxu0 0.0
        %775 = vmatpush.msra.mxu0 0.0
        %776 = vmatpush.msra.mxu0 0.0
        %777 = vmatpush.msra.mxu0 %v757
        %778 = vmatmul.f32.gmra.mxu0 %v760
        %v779 = vpop.f32.mrf.mxu0
        %v780 = vadd.f32 0.0, %v779
        %781 = vdwg.mxu0
        %v782 = vld [vmem:[#allocation10 + $0x60] sm:$0xff]
        %v783 = vld [vmem:[#allocation10 + $0x68] sm:$0xff]
        %v784 = vld [vmem:[#allocation10 + $0x70] sm:$0xff]
        %v785 = vld [vmem:[#allocation10 + $0x78] sm:$0xff]
        %v787 = vsel %vm433, %v780, 0
        %789 = vmatpush.msra.mxu0 0.0
        %790 = vmatpush.msra.mxu0 0.0
        %791 = vmatpush.msra.mxu0 0.0
        %792 = vmatpush.msra.mxu0 0.0
        %793 = vmatpush.msra.mxu0 0.0
        %794 = vmatpush.msra.mxu0 0.0
        %795 = vmatpush.msra.mxu0 0.0
        %796 = vmatpush.msra.mxu0 0.0
        %797 = vmatpush.msra.mxu0 0.0
        %798 = vmatpush.msra.mxu0 0.0
        %799 = vmatpush.msra.mxu0 0.0
        %800 = vmatpush.msra.mxu0 0.0
        %801 = vmatpush.msra.mxu0 %v785
        %802 = vmatpush.msra.mxu0 %v784
        %803 = vmatpush.msra.mxu0 %v783
        %804 = vmatpush.msra.mxu0 %v782
        %805 = vmatmul.f32.gmra.mxu0 %v787
        %v806 = vpop.f32.mrf.mxu0
        %v807 = vadd.f32 0.0, %v806
        %808 = vdwg.mxu0
        %v809 = vadd.f32 %v714, %v807
        %v810 = vld [vmem:[%s5] sm:$0x1]
        %v812 = vperm.slane %v810, 0
        %v814 = vadd.f32 %v809, %v812
        %v815 = vadd.f32 %v814, %v429
        %816 = vadd.xlane.f32.xlu0 %v815
        %v817 = vpop.xlane.xlu0 %816
        %v818 = vrcp.pop 128.0
        %v819 = vmul.f32 128.0, %v818
        %v820 = vsub.f32 1.0, %v819
        %v821 = vmul.f32 %v818, %v820
        %v822 = vadd.f32 %v818, %v821
        %vm823 = vweird.f32 %v818
        %v824 = vsel %vm823, %v818, %v822
        %v825 = vmul.f32 %v817, %v824
        %v826 = vsub.f32 %v815, %v825
        %v827 = vmul.f32 %v826, %v826
        %828 = vadd.xlane.f32.xlu0 %v827
        %v829 = vpop.xlane.xlu0 %828
        %v830 = vmul.f32 %v829, %v824
        %v831 = vld [vmem:[%s6] sm:$0x1]
        %v832 = vadd.f32 %v830, 1e-06
        %v833 = vrsqrt.pop %v832
        %v834 = vmul.f32 %v833, %v832
        %v835 = vmul.f32 %v834, %v833
        %v836 = vmul.f32 0.5, %v835
        %v837 = vsub.f32 1.5, %v836
        %v838 = vmul.f32 %v833, %v837
        %vm839 = vweird.f32 %v832
        %vm840 = vweird.f32 %v833
        %vm841 = vmor %vm839, %vm840
        %v842 = vsel %vm841, %v833, %v838
        %v843 = vmul.f32 %v826, %v842
        %v845 = vperm.slane %v831, 0
        %v847 = vmul.f32 %v845, %v843
        %v848 = vld [vmem:[%s7] sm:$0x1]
        %v850 = vperm.slane %v848, 0
        %v852 = vadd.f32 %v847, %v850
        %v853 = vmul.f32 %v852, 0.9
        %854 = vst [vmem:[%s428] sm:$0xff] %v853
        %s855 = sand.u32 %s220, 1
        %s856 = scalar_lea.sflag [#allocation4], %s855
        %s857 = sand.u32 %s220, 1
        %s858 = smul.addr %s857, 8
        %s859 = scalar_lea.vmem [#allocation11], %s858
        // Predicated region
        $region73: #{tpu_custom_call.1} parent=51 // pred_check
          %p860 = pneg %p230
        $region74: #{tpu_custom_call.1} parent=51 // pred_check_branch
          %862 = sbr.rel (%p860) target = $region76
        $region75: #{tpu_custom_call.1} parent=51 // pred_region
          %864 = vsyncadd %s856, 0
          %s865 = smul.addr %s29, 8
          %s866 = scalar_lea.hbm %s8, %s865
          %s868 = sshll.u32 %s859, 4
          %s869 = int_to_ptr.vmem [resolvable:$true] %s868
          %s870 = sshll.u32 %s866, 4
          %s871 = int_to_ptr.hbm [resolvable:$true] %s870
          %873 = dma.vmem_to_hbm [thread:$0]  %s869, 128, %s871, %s856
        $region76: #{tpu_custom_call.1} parent=51 // pred_fallthru
          _
      $region52: #{tpu_custom_call.1} parent=5 // pred_fallthru
        _
      %p874 = scmp.le.s32.totalorder 2, %s24
      // Predicated region
      $region77: #{tpu_custom_call.1} parent=5 // pred_check
        %p875 = pneg %p874
      $region78: #{tpu_custom_call.1} parent=5 // pred_check_branch
        %877 = sbr.rel (%p875) target = $region80
      $region79: #{tpu_custom_call.1} parent=5 // pred_region
        %s878 = ssub.s32 %s24, 2
        // Predicated region
        $region81: #{tpu_custom_call.1} parent=79 // pred_check
          %p879 = pneg %p236
        $region82: #{tpu_custom_call.1} parent=79 // pred_check_branch
          %881 = sbr.rel (%p879) target = $region84
        $region83: #{tpu_custom_call.1} parent=79 // pred_region
          %s882 = sand.u32 %s221, 1
          %s883 = scalar_lea.sflag [#allocation4], %s882
          %s884 = sand.u32 %s221, 1
          %s885 = smul.addr %s884, 8
          %s886 = scalar_lea.vmem [#allocation11], %s885
          %888 = dma.done %s883, 128
        $region84: #{tpu_custom_call.1} parent=79 // pred_fallthru
          _
      $region80: #{tpu_custom_call.1} parent=5 // pred_fallthru
        _
    $region6: #{tpu_custom_call.1} parent=1 // loop_footer
      %s28 = sadd.s32 1, %s24
    $region7: #{tpu_custom_call.1} parent=1 // loop_footer_branch
      %23 = sbr.rel target = $region3
    $region8: #{tpu_custom_call.1} parent=1 // loop_exit
      _
    %889 = vsyncpa [#allocation3], 1
    %s890 = scalar_lea.sflag [#allocation3], 1
    %891 = vsyncpa %s890, 1
    %892 = vsyncpa [#allocation6], 1
    %s893 = scalar_lea.sflag [#allocation6], 1
    %894 = vsyncpa %s893, 1
    %895 = vsyncpa [#allocation9], 1
    %896 = vsyncpa [#allocation4], 1
    %s897 = scalar_lea.sflag [#allocation4], 1
    %898 = vsyncpa %s897, 1

</llo_original>
